<compile_context>
chip_gen: v6e
topology: v6e:2x2x1
jax: 0.10.0
libtpu: 0.0.40
codegen_flags: <defaults>
</compile_context>

<pallas_src>
import jax
import jax.numpy as jnp
from jax.experimental import pallas as pl
from jax.experimental.pallas import tpu as pltpu


_LANE = 128
_VMEM_TILE_BUDGET = 44 << 20   # target for streamed+resident footprint (bytes)
_VMEM_LIMIT_CAP = 56 << 20     # keep under v7x's 64 MiB/TC physical VMEM


def _round_up(x: int, m: int) -> int:
    return (x + m - 1) // m * m


def decoder_out_kernel(h1_ref, w2_ref, b2_ref, out_ref):
    # h1_ref:  (Bp, inter)  bf16  resident (same block every grid step)
    # w2_ref:  (inter, TN)  bf16  streamed column tile (tile-major, contiguous)
    # b2_ref:  (1, TN)      f32   streamed
    # out_ref: (Bp, TN)           one output column tile per step
    acc = jnp.dot(h1_ref[...], w2_ref[...],
                  preferred_element_type=jnp.float32)   # native bf16 MXU path
    out_ref[...] = jnp.tanh(acc + b2_ref[...]).astype(out_ref.dtype)


def _choose_tile(out_dim, inter, b_pad, w_item, out_item, tn_req):
    """Pick a lane-dense TN that (a) gives >=4 tiles when possible and
    (b) keeps the double-buffered footprint inside the VMEM budget."""
    out_ceil = _round_up(out_dim, _LANE)
    tn = max(_LANE, min(_round_up(int(tn_req), _LANE), out_ceil))
    if out_ceil >= 4 * _LANE:   # >=2 tiles per TC on v7x + something to prefetch
        tn = min(tn, max(_LANE, (out_ceil // 4) // _LANE * _LANE))

    def footprint(t):
        return (2 * inter * t * w_item        # W2 tile, double-buffered
                + 2 * t * 4                   # b2 tile, double-buffered
                + 2 * b_pad * t * out_item    # output tile, double-buffered
                + b_pad * inter * w_item)     # resident h1

    while tn > _LANE and footprint(tn) > _VMEM_TILE_BUDGET:
        tn -= _LANE
    return tn, footprint(tn)


def decoder_forward(z, params, sequence_length, feature_size, *,
                    tn=1024, weight_dtype=jnp.bfloat16,
                    out_dtype=jnp.float32):
    """z: (B, latent) f32 -> (B, sequence_length, feature_size) out_dtype.

    tn: requested W_2 column-tile width (auto-clamped / shrunk to fit VMEM and
        to give >=4 tiles when possible). 1024 is a good default on v6e/v7x;
        sweep 512 on v5e, 2048 on v6e if profiling shows step overhead.
    weight_dtype: streaming dtype of W_2 / h1 (bf16 -> native MXU path)."""
    wfc, bfc, w1, b1, w2, b2 = params
    B, latent = z.shape
    hidden = wfc.shape[1]
    inter = w1.shape[1]
    out_dim = sequence_length * feature_size
    assert wfc.shape == (latent, hidden)
    assert w1.shape == (hidden, inter)
    assert w2.shape == (inter, out_dim)

    b_pad = _round_up(B, 8)                         # f32 sublane
    w_item = jnp.dtype(weight_dtype).itemsize
    out_item = jnp.dtype(out_dtype).itemsize
    tn_eff, vmem_need = _choose_tile(out_dim, inter, b_pad, w_item, out_item, tn)
    out_pad = _round_up(out_dim, tn_eff)
    num_tiles = out_pad // tn_eff

    # ---- tiny fc / linear1 layers hoisted to plain XLA (f32) ---------------
    zf = z.astype(jnp.float32)
    h0 = zf @ wfc.astype(jnp.float32) + bfc.astype(jnp.float32)
    h1 = jnp.maximum(h0 @ w1.astype(jnp.float32) + b1.astype(jnp.float32), 0.0)
    h1p = jnp.pad(h1, ((0, b_pad - B), (0, 0))).astype(weight_dtype)

    # ---- tile-major relayout: each streamed tile is one contiguous DMA -----
    w2p = jnp.pad(w2, ((0, 0), (0, out_pad - out_dim))).astype(weight_dtype)
    w2t = w2p.reshape(inter, num_tiles, tn_eff).transpose(1, 0, 2)
    b2p = jnp.pad(b2.astype(jnp.float32), ((0, 0), (0, out_pad - out_dim)))

    # ---- cost hint reflects only the in-kernel (dominant) work -------------
    cost = pl.CostEstimate(
        flops=2 * b_pad * inter * out_pad,
        transcendentals=b_pad * out_pad,
        bytes_accessed=(b_pad * inter * w_item        # h1 (resident, read once)
                        + inter * out_pad * w_item    # W2 stream
                        + out_pad * 4                 # b2
                        + b_pad * out_pad * out_item) # output
    )

    vmem_limit = int(min(_VMEM_LIMIT_CAP, max(32 << 20, vmem_need + (8 << 20))))

    out = pl.pallas_call(
        decoder_out_kernel,
        out_shape=jax.ShapeDtypeStruct((b_pad, out_pad), out_dtype),
        grid_spec=pltpu.PrefetchScalarGridSpec(
            num_scalar_prefetch=0,
            grid=(num_tiles,),
            in_specs=[
                pl.BlockSpec((b_pad, inter), lambda j: (0, 0)),            # h1 (resident)
                pl.BlockSpec((None, inter, tn_eff), lambda j: (j, 0, 0)),  # W_2 tile
                pl.BlockSpec((1, tn_eff), lambda j: (0, j)),               # b_2 tile
            ],
            out_specs=pl.BlockSpec((b_pad, tn_eff), lambda j: (0, j)),
        ),
        compiler_params=pltpu.CompilerParams(
            dimension_semantics=("parallel",),     # v7x: shard tiles over 2 TCs
            vmem_limit_bytes=vmem_limit),
        cost_estimate=cost,
    )(h1p, w2t, b2p)

    out = out[:B, :out_dim]
    return out.reshape(B, sequence_length, feature_size)


def init_params(key, sequence_length, hidden_size, latent_size, feature_size):
    """Deterministic synthetic parameters (PyTorch Linear-like uniform init).

    Weights are stored already transposed to (in, out) for the kernel."""
    inter = hidden_size * 2
    out_dim = sequence_length * feature_size
    keys = jax.random.split(key, 6)

    def lin(kw, kb, fan_in, fan_out):
        bound = 1.0 / jnp.sqrt(fan_in)
        w = jax.random.uniform(kw, (fan_in, fan_out), jnp.float32, -bound, bound)
        b = jax.random.uniform(kb, (1, fan_out), jnp.float32, -bound, bound)
        return w, b

    wfc, bfc = lin(keys[0], keys[1], latent_size, hidden_size)
    w1, b1 = lin(keys[2], keys[3], hidden_size, inter)
    w2, b2 = lin(keys[4], keys[5], inter, out_dim)
    return (wfc, bfc, w1, b1, w2, b2)


def decoder_reference(z, params, weight_dtype=jnp.bfloat16):
    """Pure-JAX reference matching the kernel's numerics (bf16 MXU last layer)."""
    wfc, bfc, w1, b1, w2, b2 = params
    h0 = z.astype(jnp.float32) @ wfc.astype(jnp.float32) + bfc.astype(jnp.float32)
    h1 = jnp.maximum(h0 @ w1.astype(jnp.float32) + b1.astype(jnp.float32), 0.0)
    h2 = jnp.dot(h1.astype(weight_dtype), w2.astype(weight_dtype),
                 preferred_element_type=jnp.float32) + b2.astype(jnp.float32)
    return jnp.tanh(h2)


if __name__ == "__main__":
    # Small shapes consistent with the module's forward.
    batch = 2
    sequence_length = 8
    hidden_size = 32
    latent_size = 8
    feature_size = 16

    key = jax.random.PRNGKey(0)
    k_z, k_p = jax.random.split(key)
    z = jax.random.normal(k_z, (batch, latent_size), jnp.float32)
    params = init_params(k_p, sequence_length, hidden_size, latent_size,
                         feature_size)

    out = decoder_forward(z, params, sequence_length, feature_size)
    out = jax.block_until_ready(out)

    assert out.shape == (batch, sequence_length, feature_size)

    ref = decoder_reference(z, params, weight_dtype=jnp.bfloat16)
    ref = ref.reshape(batch, sequence_length, feature_size)
    assert jnp.allclose(out.astype(jnp.float32), ref, atol=2e-2, rtol=2e-2), \
        "mismatch vs reference"

    print("KERNEL_OK")
</pallas_src>

<mosaic_0001>
module attributes {stable_mosaic.version = 11 : i64} {
  func.func @decoder_out_kernel(%arg0: i32, %arg1: memref<8x64xbf16, #tpu.memory_space<vmem>>, %arg2: memref<1x64x128xbf16, #tpu.memory_space<vmem>>, %arg3: memref<1x128xf32, #tpu.memory_space<vmem>>, %arg4: memref<8x128xf32, #tpu.memory_space<vmem>>) attributes {dimension_semantics = [#tpu.dimension_semantics<parallel>], iteration_bounds = array<i64: 1>, scalar_prefetch = 0 : i64, scratch_operands = 0 : i64, tpu.core_type = #tpu.core_type<tc>, window_params = [{pipeline_mode = #tpu.pipeline_mode<synchronous>, transform_indices = @transform_0, window_bounds = array<i64: 8, 64>}, {transform_indices = @transform_1, window_bounds = array<i64: 1, 64, 128>}, {transform_indices = @transform_2, window_bounds = array<i64: 1, 128>}, {transform_indices = @transform_3, window_bounds = array<i64: 8, 128>}]} {
    %c0 = arith.constant 0 : index
    %c0_0 = arith.constant 0 : index
    %0 = vector.load %arg1[%c0, %c0_0] : memref<8x64xbf16, #tpu.memory_space<vmem>>, vector<8x64xbf16>
    %c0_1 = arith.constant 0 : index
    %c0_2 = arith.constant 0 : index
    %c0_3 = arith.constant 0 : index
    %1 = vector.load %arg2[%c0_1, %c0_2, %c0_3] : memref<1x64x128xbf16, #tpu.memory_space<vmem>>, vector<1x64x128xbf16>
    %2 = vector.shape_cast %1 : vector<1x64x128xbf16> to vector<64x128xbf16>
    %cst = arith.constant dense<0.000000e+00> : vector<8x128xf32>
    %3 = tpu.matmul %0, %2, %cst {dimension_numbers = #tpu.dot_dimension_numbers<[1], [0], [0], [1], [0, 0, 1, 1], [], []>} : vector<8x64xbf16>, vector<64x128xbf16>, vector<8x128xf32> -> vector<8x128xf32>
    %c0_4 = arith.constant 0 : index
    %c0_5 = arith.constant 0 : index
    %4 = vector.load %arg3[%c0_4, %c0_5] : memref<1x128xf32, #tpu.memory_space<vmem>>, vector<1x128xf32>
    %5 = vector.broadcast %4 : vector<1x128xf32> to vector<8x128xf32>
    %6 = arith.addf %3, %5 : vector<8x128xf32>
    %7 = math.tanh %6 : vector<8x128xf32>
    %c0_6 = arith.constant 0 : index
    %c0_7 = arith.constant 0 : index
    %8 = vector.load %arg4[%c0_6, %c0_7] : memref<8x128xf32, #tpu.memory_space<vmem>>, vector<8x128xf32>
    tpu.vector_store %arg4[%c0_6, %c0_7], %7 {strides = array<i32>} : memref<8x128xf32, #tpu.memory_space<vmem>>, vector<8x128xf32>,
    return
  }
  func.func @transform_0(%arg0: i32) -> (i32, i32) {
    %c0_i32 = arith.constant 0 : i32
    %c0_i32_0 = arith.constant 0 : i32
    %c0_i32_1 = arith.constant 0 : i32
    return %c0_i32, %c0_i32_0 : i32, i32
  }
  func.func @transform_1(%arg0: i32) -> (i32, i32, i32) {
    %c0_i32 = arith.constant 0 : i32
    %c0_i32_0 = arith.constant 0 : i32
    %c0_i32_1 = arith.constant 0 : i32
    return %arg0, %c0_i32, %c0_i32_0 : i32, i32, i32
  }
  func.func @transform_2(%arg0: i32) -> (i32, i32) {
    %c0_i32 = arith.constant 0 : i32
    %c0_i32_0 = arith.constant 0 : i32
    return %c0_i32, %arg0 : i32, i32
  }
  func.func @transform_3(%arg0: i32) -> (i32, i32) {
    %c0_i32 = arith.constant 0 : i32
    %c0_i32_0 = arith.constant 0 : i32
    return %c0_i32, %arg0 : i32, i32
  }
}

</mosaic_0001>

<llo_original>
// kernel: tpu_custom_call.1
$region0: #{tpu_custom_call.1}
  #allocation0 [shape = 'u32[]', space=smem, size = 0x4, offset = 0x4, fixed_abs, tag = 'smem constant byte address 0x4 - core index']
  #allocation1 [shape = 'u32[144,128]{1,0:T(1,128)}', space=vmem, size = 0x12000, scoped, tag = 'internal scratch']
  %s0 = inlined_call_operand.hbm [shape: bf16[8,64], index: 0, kind: input, shape index: {}]
  %s1 = inlined_call_operand.hbm [shape: bf16[1,64,128], index: 1, kind: input, shape index: {}]
  %s2 = inlined_call_operand.vmem [shape: f32[1,128], index: 2, kind: input, shape index: {}]
  %s3 = inlined_call_operand.hbm [shape: f32[8,128], index: 3, kind: output, shape index: {}]
  %s4 = sld [smem:[#allocation0]]
  $region30: #{tpu_custom_call.1} parent=0
    _
  %s6 = ssub.s32 1, %s4
  %s7 = scalar_select 0, %s6, %s4
  $region1: #{tpu_custom_call.1} parent=0
    #allocation2 [shape = 'u8[2048]{0}', space=vmem, size = 0x800, scoped, tag = 'input window, operand 0, single buffered']
    #allocation3 [shape = 's32[1]{0}', space=sflag, size = 0x4, scoped, tag = 'scoped memory for tpu_custom_call.1']
    #allocation4 [shape = 's32[1]{0}', space=sflag, size = 0x4, scoped, tag = 'scoped memory for tpu_custom_call.1']
    #allocation5 [shape = 'u8[16384]{0}', space=vmem, size = 0x4000, scoped, tag = 'input window, operand 1, single buffered']
    #allocation6 [shape = 's32[1]{0}', space=sflag, size = 0x4, scoped, tag = 'scoped memory for tpu_custom_call.1']
    #allocation7 [shape = 'u8[4096]{0}', space=vmem, size = 0x1000, scoped, tag = 'output window, operand 0, single buffered']
    %8 = vsyncpa [#allocation3], 0
    %9 = vsyncpa [#allocation6], 0
    %10 = vsyncpa [#allocation4], 0
    // Predicated region
    $region2: #{tpu_custom_call.1} parent=1 // pred_check
      _
    $region3: #{tpu_custom_call.1} parent=1 // pred_check_branch
      %12 = sbr.rel (0) target = $region5
    $region4: #{tpu_custom_call.1} parent=1 // pred_region
      %s14 = ssub.s32 64, 64
      %15 = vsyncadd [#allocation3], %s14
      %s17 = sshll.u32 [#allocation2], 4
      %s18 = int_to_ptr.vmem [resolvable:$true] %s17
      %20 = dma.hbm_to_vmem [thread:$0]  %s0, 64, %s18, [#allocation3]
    $region5: #{tpu_custom_call.1} parent=1 // pred_fallthru
      _
    // Predicated region
    $region6: #{tpu_custom_call.1} parent=1 // pred_check
      _
    $region7: #{tpu_custom_call.1} parent=1 // pred_check_branch
      %22 = sbr.rel (0) target = $region9
    $region8: #{tpu_custom_call.1} parent=1 // pred_region
      %s24 = ssub.s32 512, 512
      %25 = vsyncadd [#allocation6], %s24
      %s26 = sshll.u32 [#allocation5], 4
      %s27 = int_to_ptr.vmem [resolvable:$true] %s26
      %32 = dma.hbm_to_vmem [thread:$0]  %s1, 512, %s27, [#allocation6], 64, 64, 4
    $region9: #{tpu_custom_call.1} parent=1 // pred_fallthru
      _
    // Predicated region
    $region10: #{tpu_custom_call.1} parent=1 // pred_check
      _
    $region11: #{tpu_custom_call.1} parent=1 // pred_check_branch
      %34 = sbr.rel (0) target = $region13
    $region12: #{tpu_custom_call.1} parent=1 // pred_region
      _
    $region13: #{tpu_custom_call.1} parent=1 // pred_fallthru
      _
    // Predicated region
    $region14: #{tpu_custom_call.1} parent=1 // pred_check
      _
    $region15: #{tpu_custom_call.1} parent=1 // pred_check_branch
      %36 = sbr.rel (0) target = $region17
    $region16: #{tpu_custom_call.1} parent=1 // pred_region
      %37 = dma.done [#allocation3], 64
    $region17: #{tpu_custom_call.1} parent=1 // pred_fallthru
      _
    // Predicated region
    $region18: #{tpu_custom_call.1} parent=1 // pred_check
      _
    $region19: #{tpu_custom_call.1} parent=1 // pred_check_branch
      %39 = sbr.rel (0) target = $region21
    $region20: #{tpu_custom_call.1} parent=1 // pred_region
      %40 = dma.done [#allocation6], 512
    $region21: #{tpu_custom_call.1} parent=1 // pred_fallthru
      _
    %v42 = vld [vmem:[#allocation2] sm:$0xf]
    %v43 = vld [vmem:[#allocation5] sm:$0xf]
    %v44 = vld [vmem:[#allocation5 + $0x4] sm:$0xf]
    %v45 = vld [vmem:[#allocation5 + $0x8] sm:$0xf]
    %v46 = vld [vmem:[#allocation5 + $0xc] sm:$0xf]
    %v47 = vld [vmem:[#allocation5 + $0x10] sm:$0xf]
    %v48 = vld [vmem:[#allocation5 + $0x14] sm:$0xf]
    %v49 = vld [vmem:[#allocation5 + $0x18] sm:$0xf]
    %v50 = vld [vmem:[#allocation5 + $0x1c] sm:$0xf]
    %v51 = vld [vmem:[%s2] sm:$0x1]
    %v53 = vlaneseq
    %v54 = vshrl.u32 %v53, 7
    %v55 = vsub.s32 0, %v54
    %v56 = vrot.slane %v51, %v55
    %v66 = vunpack.c.l.b16 %v43
    %v67 = vunpack.c.l.b16 %v44
    %v68 = vunpack.c.l.b16 %v45
    %v69 = vunpack.c.l.b16 %v46
    %v70 = vunpack.c.l.b16 %v47
    %v71 = vunpack.c.l.b16 %v48
    %v72 = vunpack.c.l.b16 %v49
    %v73 = vunpack.c.l.b16 %v50
    %v74 = vpack.c.b16 %v67, %v66
    %v75 = vpack.c.b16 %v69, %v68
    %v76 = vpack.c.b16 %v71, %v70
    %v77 = vpack.c.b16 %v73, %v72
    %vm82 = vcmask 523264
    %v84 = vsel %vm82, %v42, 0
    %86 = vmatprep.subr.bf16.mxu0 0
    %87 = vmatpush1.bf16.msra.mxu0 0
    %88 = vmatprep.subr.bf16.mxu0 0
    %89 = vmatpush1.bf16.msra.mxu0 0
    %90 = vmatprep.subr.bf16.mxu0 0
    %91 = vmatpush1.bf16.msra.mxu0 0
    %92 = vmatprep.subr.bf16.mxu0 0
    %93 = vmatpush1.bf16.msra.mxu0 0
    %94 = vmatprep.subr.bf16.mxu0 0
    %95 = vmatpush1.bf16.msra.mxu0 %v77
    %96 = vmatprep.subr.bf16.mxu0 0
    %97 = vmatpush1.bf16.msra.mxu0 %v76
    %98 = vmatprep.subr.bf16.mxu0 0
    %99 = vmatpush1.bf16.msra.mxu0 %v75
    %100 = vmatprep.subr.bf16.mxu0 0
    %101 = vmatpush1.bf16.msra.mxu0 %v74
    %102 = vmatprep.subr.bf16.mxu0 0
    %103 = vmatpush2.bf16.msra.mxu0 0
    %104 = vmatprep.subr.bf16.mxu0 0
    %105 = vmatpush2.bf16.msra.mxu0 0
    %106 = vmatprep.subr.bf16.mxu0 0
    %107 = vmatpush2.bf16.msra.mxu0 0
    %108 = vmatprep.subr.bf16.mxu0 0
    %109 = vmatpush2.bf16.msra.mxu0 0
    %110 = vmatprep.subr.bf16.mxu0 0
    %111 = vmatpush2.bf16.msra.mxu0 0
    %112 = vmatprep.subr.bf16.mxu0 0
    %113 = vmatpush2.bf16.msra.mxu0 0
    %114 = vmatprep.subr.bf16.mxu0 0
    %115 = vmatpush2.bf16.msra.mxu0 0
    %116 = vmatprep.subr.bf16.mxu0 0
    %117 = vmatpush2.bf16.msra.mxu0 0
    %118 = vmatprep.mubr.bf16.mxu0 0
    %119 = vmatmul.mubr.bf16.gmra.mxu0 %v84
    %v120 = vpop.f32.mrf.mxu0
    %v121 = vadd.f32 %v56, %v120
    %v122 = vpop.f32.mrf.mxu0
    %v123 = vpop.f32.mrf.mxu0
    %v124 = vpop.f32.mrf.mxu0
    %125 = vdwg.mxu0
    %v126 = vtanh.pop %v121
    %127 = vst [vmem:[#allocation7] sm:$0xff] %v126
    // Predicated region
    $region22: #{tpu_custom_call.1} parent=1 // pred_check
      _
    $region23: #{tpu_custom_call.1} parent=1 // pred_check_branch
      %129 = sbr.rel (0) target = $region25
    $region24: #{tpu_custom_call.1} parent=1 // pred_region
      %s131 = ssub.s32 128, 128
      %132 = vsyncadd [#allocation4], %s131
      %s134 = sshll.u32 [#allocation7], 4
      %s135 = int_to_ptr.vmem [resolvable:$true] %s134
      %137 = dma.vmem_to_hbm [thread:$0]  %s135, 128, %s3, [#allocation4]
    $region25: #{tpu_custom_call.1} parent=1 // pred_fallthru
      _
    // Predicated region
    $region26: #{tpu_custom_call.1} parent=1 // pred_check
      _
    $region27: #{tpu_custom_call.1} parent=1 // pred_check_branch
      %139 = sbr.rel (0) target = $region29
    $region28: #{tpu_custom_call.1} parent=1 // pred_region
      %140 = dma.done [#allocation4], 128
    $region29: #{tpu_custom_call.1} parent=1 // pred_fallthru
      _
    %141 = vsyncpa [#allocation3], 1
    %142 = vsyncpa [#allocation6], 1
    %143 = vsyncpa [#allocation4], 1

</llo_original>
